<compile_context>
chip_gen: v5e
topology: v5e:2x2
jax: 0.10.0
libtpu: 0.0.40
codegen_flags: <defaults>
</compile_context>

<pallas_src>
import functools
import math

import jax
import jax.numpy as jnp
from jax import lax
from jax.experimental import pallas as pl
from jax.experimental.pallas import tpu as pltpu

_INV_SQRT2 = 1.0 / math.sqrt(2.0)

_LANE = 128
_C_CANDIDATES = (4096, 2048, 1024, 512, 256, 128)

# Abramowitz & Stegun 7.1.26 coefficients for erf on [0, inf); |erf err| <= 1.5e-7.
_AS_P = 0.3275911
_AS_A1 = 0.254829592
_AS_A2 = -0.284496736
_AS_A3 = 1.421413741
_AS_A4 = -1.453152027
_AS_A5 = 1.061405429


def _phi(x):
    """Phi(x) = 0.5 * (1 + erf(x / sqrt(2))) as one fused, single-branch chain.

    A&S 7.1.26 on z = |x|/sqrt(2) with the 1/sqrt(2), +1 and *0.5 folded in:
    only abs/mul/add/div/exp/select (~20 VPU ops + exp & reciprocal on the EUP
    slot).  |erf error| <= 1.5e-7  ->  |GELU error| <= 7.5e-8 * |x|.
    No explicit clamp is needed for large |x|: exp(-z*z) underflows to 0,
    giving Phi -> exactly 0 / 1.
    """
    z = jnp.abs(x) * _INV_SQRT2
    t = 1.0 / (1.0 + _AS_P * z)
    poly = t * (_AS_A1 + t * (_AS_A2 + t * (_AS_A3 + t * (_AS_A4 + t * _AS_A5))))
    half_erfc = (0.5 * poly) * jnp.exp(-(z * z))   # 0.5 * erfc(z),  z >= 0
    return jnp.where(x >= 0, 1.0 - half_erfc, half_erfc)


def _gelu_kernel(x_ref, o_ref, *, compute_dtype):
    # TODO(synk): if bit-exact parity with torch.erf is ever required, swap
    # _phi for an XLA-exact erf once Mosaic exposes an erf lowering.
    x = x_ref[...].astype(compute_dtype)
    o_ref[...] = (x * _phi(x)).astype(o_ref.dtype)


def _round_up(a, b):
    return ((a + b - 1) // b) * b


def _device_kind():
    try:
        return jax.devices()[0].device_kind.lower()
    except Exception:  # defensive: fall back to generic defaults
        return ""


def gelu_pallas(x):
    """GELU(x) = x * 0.5 * (1 + erf(x / sqrt(2))) for floating-point x."""
    orig_shape = x.shape
    orig_dtype = x.dtype
    n = x.size
    if n == 0:
        return x

    kind = _device_kind()
    is_v5 = "v5" in kind
    is_v6 = "v6" in kind
    is_v7 = ("v7" in kind) or ("tpu7" in kind) or ("7x" in kind)

    itemsize = jnp.dtype(orig_dtype).itemsize
    # Sublane packing granularity: 8 for 32-bit, 16 for 16-bit, 32 for 8-bit.
    sub = max(8, 32 // max(itemsize, 1))

    # Packed bf16 compute on v6e/v7x (bf16 VPU: 2 elem/lane on the binding VALU
    # slot); v5e has no bf16 VPU, and every other dtype computes in f32.
    if orig_dtype == jnp.bfloat16 and (is_v6 or is_v7) and not is_v5:
        compute_dtype = jnp.bfloat16
    else:
        compute_dtype = jnp.float32

    flat = x.reshape(-1)
    ragged = (n % _LANE) != 0
    if ragged:
        # Pad to a full (sub, 128) granule.  allow_input_fusion below lets XLA
        # fuse this pad into the kernel's input DMA instead of a standalone HBM
        # pass; only the output slice remains as extra traffic.
        # TODO(synk): handle the ragged tail fully in-kernel (masked final
        # block) to also drop the output-slice pass.
        total = _round_up(n, sub * _LANE)
        flat = jnp.pad(flat, (0, total - n))
    else:
        total = n

    # Widest lane-dense column count that divides the element count and leaves
    # at least `sub` rows -> unmasked vst stores, few long DMA descriptors.
    C = _LANE
    for c in _C_CANDIDATES:
        if total % c == 0 and total // c >= sub:
            C = c
            break
    rows = total // C
    x2d = flat.reshape(rows, C)

    # Generation-aware block size: ~4 MiB on v5e/v6e (128 MiB physical VMEM),
    # ~2 MiB on v7x (64 MiB VMEM + headroom for f32 temps of narrow dtypes).
    target_block_bytes = (2 << 20) if is_v7 else (4 << 20)

    if rows <= sub:
        tr = rows                     # tiny tensor: single full-array block
    else:
        target_elems = max(target_block_bytes // itemsize, sub * C)
        tr_target = _round_up(max(target_elems // C, sub), sub)
        # Keep >= ~8 grid steps on big tensors so both v7x TensorCores get work.
        tr_split = _round_up(pl.cdiv(rows, 8), sub)
        tr = min(tr_target, max(sub, tr_split))
        tr = min(tr, _round_up(rows, sub))
        # Best-effort even step count: the 1-D "parallel" axis is split across
        # v7x's two TensorCores; avoid stranding a lone tail block on one core.
        steps = pl.cdiv(rows, tr)
        if steps > 1 and steps % 2 == 1:
            tr_even = _round_up(pl.cdiv(rows, steps + 1), sub)
            if tr_even >= sub:
                tr = tr_even

    grid = (pl.cdiv(rows, tr),)

    # VMEM request sized from the actual footprint: double-buffered in + out
    # blocks plus compute-dtype temporaries, with a little slack.  Stays well
    # under v7x's 64 MiB physical VMEM and above v5e's 16 MiB scoped default.
    block_bytes = tr * C * itemsize
    compute_bytes = tr * C * jnp.dtype(compute_dtype).itemsize
    vmem_need = 4 * block_bytes + 2 * compute_bytes + (1 << 20)
    vmem_limit = int(min(max(vmem_need, 16 << 20), 48 << 20))

    compiler_kwargs = dict(
        dimension_semantics=("parallel",),
        vmem_limit_bytes=vmem_limit,
    )
    if ragged:
        compiler_kwargs["allow_input_fusion"] = [True]

    out2d = pl.pallas_call(
        functools.partial(_gelu_kernel, compute_dtype=compute_dtype),
        out_shape=jax.ShapeDtypeStruct((rows, C), orig_dtype),
        grid_spec=pltpu.PrefetchScalarGridSpec(
            num_scalar_prefetch=0,
            grid=grid,
            in_specs=[pl.BlockSpec((tr, C), lambda i: (i, 0))],
            out_specs=pl.BlockSpec((tr, C), lambda i: (i, 0)),
        ),
        compiler_params=pltpu.CompilerParams(**compiler_kwargs),
    )(x2d)

    out = out2d.reshape(-1)
    if ragged:
        out = out[:n]
    return out.reshape(orig_shape)


if __name__ == "__main__":
    key = jax.random.PRNGKey(0)
    x = jax.random.normal(key, (2, 4, 16, 16), dtype=jnp.float32)

    y = jax.block_until_ready(gelu_pallas(x))
    y_ref = x * 0.5 * (1.0 + lax.erf(x * _INV_SQRT2))
    assert y.shape == x.shape and y.dtype == x.dtype
    # |erf err| <= 1.5e-7  ->  |GELU err| <= 7.5e-8 * |x| (plus f32 rounding).
    assert jnp.allclose(y, y_ref, atol=2e-6, rtol=2e-5)

    # Ragged-size path (pad fused into the input DMA + output slice only).
    xr = jax.random.normal(jax.random.PRNGKey(1), (3, 7, 11), dtype=jnp.float32)
    yr = jax.block_until_ready(gelu_pallas(xr))
    yr_ref = xr * 0.5 * (1.0 + lax.erf(xr * _INV_SQRT2))
    assert yr.shape == xr.shape and jnp.allclose(yr, yr_ref, atol=2e-6, rtol=2e-5)

    # bf16 storage (packed bf16 compute on v6e/v7x, f32 compute elsewhere).
    xb = x.astype(jnp.bfloat16)
    yb = jax.block_until_ready(gelu_pallas(xb))
    assert yb.shape == xb.shape and yb.dtype == jnp.bfloat16
    assert jnp.allclose(yb.astype(jnp.float32), y_ref, atol=3e-2, rtol=3e-2)

    print("KERNEL_OK")
</pallas_src>

<mosaic_0001>
module attributes {stable_mosaic.version = 11 : i64} {
  func.func @_gelu_kernel(%arg0: i32, %arg1: memref<8x256xf32, #tpu.memory_space<vmem>>, %arg2: memref<8x256xf32, #tpu.memory_space<vmem>>) attributes {dimension_semantics = [#tpu.dimension_semantics<parallel>], iteration_bounds = array<i64: 1>, scalar_prefetch = 0 : i64, scratch_operands = 0 : i64, tpu.core_type = #tpu.core_type<tc>, window_params = [{transform_indices = @transform_0, window_bounds = array<i64: 8, 256>}, {transform_indices = @transform_1, window_bounds = array<i64: 8, 256>}]} {
    %c0 = arith.constant 0 : index
    %c0_0 = arith.constant 0 : index
    %0 = vector.load %arg1[%c0, %c0_0] : memref<8x256xf32, #tpu.memory_space<vmem>>, vector<8x256xf32>
    %1 = math.absf %0 : vector<8x256xf32>
    %cst = arith.constant 0.707106769 : f32
    %2 = vector.broadcast %cst : f32 to vector<8x256xf32>
    %3 = arith.mulf %1, %2 : vector<8x256xf32>
    %cst_1 = arith.constant 0.327591091 : f32
    %4 = vector.broadcast %cst_1 : f32 to vector<8x256xf32>
    %5 = arith.mulf %4, %3 : vector<8x256xf32>
    %cst_2 = arith.constant 1.000000e+00 : f32
    %6 = vector.broadcast %cst_2 : f32 to vector<8x256xf32>
    %7 = arith.addf %6, %5 : vector<8x256xf32>
    %cst_3 = arith.constant 1.000000e+00 : f32
    %8 = vector.broadcast %cst_3 : f32 to vector<8x256xf32>
    %9 = arith.divf %8, %7 : vector<8x256xf32>
    %cst_4 = arith.constant 1.06140542 : f32
    %10 = vector.broadcast %cst_4 : f32 to vector<8x256xf32>
    %11 = arith.mulf %9, %10 : vector<8x256xf32>
    %cst_5 = arith.constant -1.45315206 : f32
    %12 = vector.broadcast %cst_5 : f32 to vector<8x256xf32>
    %13 = arith.addf %12, %11 : vector<8x256xf32>
    %14 = arith.mulf %9, %13 : vector<8x256xf32>
    %cst_6 = arith.constant 1.42141378 : f32
    %15 = vector.broadcast %cst_6 : f32 to vector<8x256xf32>
    %16 = arith.addf %15, %14 : vector<8x256xf32>
    %17 = arith.mulf %9, %16 : vector<8x256xf32>
    %cst_7 = arith.constant -0.284496725 : f32
    %18 = vector.broadcast %cst_7 : f32 to vector<8x256xf32>
    %19 = arith.addf %18, %17 : vector<8x256xf32>
    %20 = arith.mulf %9, %19 : vector<8x256xf32>
    %cst_8 = arith.constant 0.254829586 : f32
    %21 = vector.broadcast %cst_8 : f32 to vector<8x256xf32>
    %22 = arith.addf %21, %20 : vector<8x256xf32>
    %23 = arith.mulf %9, %22 : vector<8x256xf32>
    %cst_9 = arith.constant 5.000000e-01 : f32
    %24 = vector.broadcast %cst_9 : f32 to vector<8x256xf32>
    %25 = arith.mulf %24, %23 : vector<8x256xf32>
    %26 = arith.mulf %3, %3 : vector<8x256xf32>
    %cst_10 = arith.constant 0.000000e+00 : f32
    %27 = vector.broadcast %cst_10 : f32 to vector<8x256xf32>
    %28 = arith.subf %27, %26 : vector<8x256xf32>
    %29 = math.exp %28 : vector<8x256xf32>
    %30 = arith.mulf %25, %29 : vector<8x256xf32>
    %cst_11 = arith.constant 0.000000e+00 : f32
    %31 = vector.broadcast %cst_11 : f32 to vector<8x256xf32>
    %32 = arith.cmpf oge, %0, %31 : vector<8x256xf32>
    %cst_12 = arith.constant 1.000000e+00 : f32
    %33 = vector.broadcast %cst_12 : f32 to vector<8x256xf32>
    %34 = arith.subf %33, %30 : vector<8x256xf32>
    %35 = arith.select %32, %34, %30 : vector<8x256xi1>, vector<8x256xf32>
    %36 = arith.mulf %0, %35 : vector<8x256xf32>
    %c0_13 = arith.constant 0 : index
    %c0_14 = arith.constant 0 : index
    %37 = vector.load %arg2[%c0_13, %c0_14] : memref<8x256xf32, #tpu.memory_space<vmem>>, vector<8x256xf32>
    tpu.vector_store %arg2[%c0_13, %c0_14], %36 {strides = array<i32>} : memref<8x256xf32, #tpu.memory_space<vmem>>, vector<8x256xf32>,
    return
  }
  func.func @transform_0(%arg0: i32) -> (i32, i32) {
    %c0_i32 = arith.constant 0 : i32
    %c0_i32_0 = arith.constant 0 : i32
    return %arg0, %c0_i32 : i32, i32
  }
  func.func @transform_1(%arg0: i32) -> (i32, i32) {
    %c0_i32 = arith.constant 0 : i32
    %c0_i32_0 = arith.constant 0 : i32
    return %arg0, %c0_i32 : i32, i32
  }
}

</mosaic_0001>

<llo_original>
// kernel: tpu_custom_call.1
$region0: #{tpu_custom_call.1}
  #allocation0 [shape = 'u32[]', space=smem, size = 0x4, offset = 0x4, fixed_abs, tag = 'smem constant byte address 0x4 - core index']
  #allocation1 [shape = 'u32[72,128]{1,0:T(1,128)}', space=vmem, size = 0x9000, scoped, tag = 'internal scratch']
  %s0 = inlined_call_operand.hbm [shape: f32[8,256], index: 0, kind: input, shape index: {}]
  %s1 = inlined_call_operand.hbm [shape: f32[8,256], index: 1, kind: output, shape index: {}]
  %s2 = sld [smem:[#allocation0]]
  $region18: #{tpu_custom_call.1} parent=0
    _
  %s4 = ssub.s32 1, %s2
  %s5 = scalar_select 0, %s4, %s2
  $region1: #{tpu_custom_call.1} parent=0
    #allocation2 [shape = 'u8[8192]{0}', space=vmem, size = 0x2000, scoped, tag = 'input window, operand 0, single buffered']
    #allocation3 [shape = 's32[1]{0}', space=sflag, size = 0x4, scoped, tag = 'scoped memory for tpu_custom_call.1']
    #allocation4 [shape = 's32[1]{0}', space=sflag, size = 0x4, scoped, tag = 'scoped memory for tpu_custom_call.1']
    #allocation5 [shape = 'u8[8192]{0}', space=vmem, size = 0x2000, scoped, tag = 'output window, operand 0, single buffered']
    %6 = vsyncpa [#allocation3], 0
    %7 = vsyncpa [#allocation4], 0
    // Predicated region
    $region2: #{tpu_custom_call.1} parent=1 // pred_check
      _
    $region3: #{tpu_custom_call.1} parent=1 // pred_check_branch
      %9 = sbr.rel (0) target = $region5
    $region4: #{tpu_custom_call.1} parent=1 // pred_region
      %11 = vsyncadd [#allocation3], 0
      %s13 = sshll.u32 %s0, 4
      %s14 = int_to_ptr.hbm [resolvable:$true] %s13
      %s15 = sshll.u32 [#allocation2], 4
      %s16 = int_to_ptr.vmem [resolvable:$true] %s15
      %18 = dma.hbm_to_vmem [thread:$0]  %s14, 256, %s16, [#allocation3]
    $region5: #{tpu_custom_call.1} parent=1 // pred_fallthru
      _
    // Predicated region
    $region6: #{tpu_custom_call.1} parent=1 // pred_check
      _
    $region7: #{tpu_custom_call.1} parent=1 // pred_check_branch
      %20 = sbr.rel (0) target = $region9
    $region8: #{tpu_custom_call.1} parent=1 // pred_region
      %22 = dma.done [#allocation3], 256
    $region9: #{tpu_custom_call.1} parent=1 // pred_fallthru
      _
    %v23 = vld [vmem:[#allocation2] sm:$0xff]
    %v24 = vld [vmem:[#allocation2 + $0x8] sm:$0xff]
    %v25 = vand.u32 2147483647, %v23
    %v26 = vand.u32 2147483647, %v24
    %v27 = vmul.f32 %v25, 0.70710677
    %v28 = vmul.f32 %v26, 0.70710677
    %v29 = vmul.f32 %v27, 0.3275911
    %v30 = vmul.f32 %v28, 0.3275911
    %v31 = vadd.f32 %v29, 1.0
    %v32 = vadd.f32 %v30, 1.0
    %v33 = vrcp.pop %v31
    %v34 = vmul.f32 %v31, %v33
    %v35 = vsub.f32 1.0, %v34
    %v36 = vmul.f32 %v33, %v35
    %v37 = vadd.f32 %v33, %v36
    %vm38 = vweird.f32 %v31
    %vm39 = vweird.f32 %v33
    %vm40 = vmor %vm38, %vm39
    %v41 = vsel %vm40, %v33, %v37
    %v42 = vand.u32 2147483647, %v31
    %vm43 = vcmp.eq.f32.partialorder %v42, 8.507059e+37
    %v44 = vand.u32 %v31, 2147483648
    %v45 = vor.u32 1.1754944e-38, %v44
    %v46 = vsel %vm43, %v45, %v41
    %v47 = vmul.f32 1.0, %v46
    %v48 = vrcp.pop %v32
    %v49 = vmul.f32 %v32, %v48
    %v50 = vsub.f32 1.0, %v49
    %v51 = vmul.f32 %v48, %v50
    %v52 = vadd.f32 %v48, %v51
    %vm53 = vweird.f32 %v32
    %vm54 = vweird.f32 %v48
    %vm55 = vmor %vm53, %vm54
    %v56 = vsel %vm55, %v48, %v52
    %v57 = vand.u32 2147483647, %v32
    %vm58 = vcmp.eq.f32.partialorder %v57, 8.507059e+37
    %v59 = vand.u32 %v32, 2147483648
    %v60 = vor.u32 1.1754944e-38, %v59
    %v61 = vsel %vm58, %v60, %v56
    %v62 = vmul.f32 1.0, %v61
    %v63 = vmul.f32 %v47, 1.0614054
    %v64 = vmul.f32 %v62, 1.0614054
    %v65 = vadd.f32 %v63, -1.4531521
    %v66 = vadd.f32 %v64, -1.4531521
    %v67 = vmul.f32 %v47, %v65
    %v68 = vmul.f32 %v62, %v66
    %v69 = vadd.f32 %v67, 1.4214138
    %v70 = vadd.f32 %v68, 1.4214138
    %v71 = vmul.f32 %v47, %v69
    %v72 = vmul.f32 %v62, %v70
    %v73 = vadd.f32 %v71, -0.28449672
    %v74 = vadd.f32 %v72, -0.28449672
    %v75 = vmul.f32 %v47, %v73
    %v76 = vmul.f32 %v62, %v74
    %v77 = vadd.f32 %v75, 0.2548296
    %v78 = vadd.f32 %v76, 0.2548296
    %v79 = vmul.f32 %v47, %v77
    %v80 = vmul.f32 %v62, %v78
    %v81 = vmul.f32 %v79, 0.5
    %v82 = vmul.f32 %v80, 0.5
    %v83 = vmul.f32 %v27, %v27
    %v84 = vmul.f32 %v28, %v28
    %v85 = vsub.f32 0.0, %v83
    %v86 = vsub.f32 0.0, %v84
    %v87 = vmul.f32 %v85, 1.442695
    %v88 = vpow.pop %v87
    %v89 = vmul.f32 %v86, 1.442695
    %v90 = vpow.pop %v89
    %v91 = vmul.f32 %v81, %v88
    %v92 = vmul.f32 %v82, %v90
    %vm93 = vcmp.ge.f32.partialorder %v23, 0.0
    %vm94 = vcmp.ge.f32.partialorder %v24, 0.0
    %v95 = vsub.f32 1.0, %v91
    %v96 = vsub.f32 1.0, %v92
    %v97 = vsel %vm93, %v95, %v91
    %v98 = vsel %vm94, %v96, %v92
    %v99 = vmul.f32 %v23, %v97
    %v100 = vmul.f32 %v24, %v98
    %101 = vst [vmem:[#allocation5] sm:$0xff] %v99
    %102 = vst [vmem:[#allocation5 + $0x8] sm:$0xff] %v100
    // Predicated region
    $region10: #{tpu_custom_call.1} parent=1 // pred_check
      _
    $region11: #{tpu_custom_call.1} parent=1 // pred_check_branch
      %104 = sbr.rel (0) target = $region13
    $region12: #{tpu_custom_call.1} parent=1 // pred_region
      %106 = vsyncadd [#allocation4], 0
      %s108 = sshll.u32 [#allocation5], 4
      %s109 = int_to_ptr.vmem [resolvable:$true] %s108
      %s110 = sshll.u32 %s1, 4
      %s111 = int_to_ptr.hbm [resolvable:$true] %s110
      %113 = dma.vmem_to_hbm [thread:$0]  %s109, 256, %s111, [#allocation4]
    $region13: #{tpu_custom_call.1} parent=1 // pred_fallthru
      _
    // Predicated region
    $region14: #{tpu_custom_call.1} parent=1 // pred_check
      _
    $region15: #{tpu_custom_call.1} parent=1 // pred_check_branch
      %115 = sbr.rel (0) target = $region17
    $region16: #{tpu_custom_call.1} parent=1 // pred_region
      %117 = dma.done [#allocation4], 256
    $region17: #{tpu_custom_call.1} parent=1 // pred_fallthru
      _
    %118 = vsyncpa [#allocation3], 1
    %119 = vsyncpa [#allocation4], 1

</llo_original>
